<compile_context>
chip_gen: v5e
topology: v5e:2x2
jax: 0.10.0
libtpu: 0.0.40
codegen_flags: <defaults>
</compile_context>

<pallas_src>
import jax
import jax.numpy as jnp
from jax.experimental import pallas as pl
from jax.experimental.pallas import tpu as pltpu


def _gem_kernel(s_ref, x_ref, o_ref, *, eps):
    # s_ref: (2,) f32 in SMEM: [p, 1/p]  (already exp'd in the wrapper)
    # x_ref: (TN, TC, HW) f32 in VMEM
    # o_ref: (TN, TC, 1)  f32 in VMEM
    p = s_ref[0]
    inv_p = s_ref[1]
    x = x_ref[...]
    xc = jnp.maximum(x, eps)                        # clamp(min=eps) -> strictly > 0
    xp = jnp.exp(p * jnp.log(xc))                   # xc ** p (dynamic exponent, EUP)
    m = jnp.mean(xp, axis=-1, keepdims=True)        # avg pool over the full H*W extent
    o_ref[...] = jnp.exp(inv_p * jnp.log(m))        # m ** (1/p)


def _choose_tiles(N, C, HW, bytes_per_elem=4, target_bytes=4 * 1024 * 1024):
    """Pick (TN, TC): fold batch for small maps, tile channels for big ones.

    Keeps each x block at ~target_bytes so a 2-deep pipeline (2 bufs/input)
    comfortably fits the scoped VMEM budget on every TPU generation.
    """
    block_c_bytes = C * HW * bytes_per_elem
    if block_c_bytes <= target_bytes:
        # Full C + full HW per block; fold as many batch elements as fit.
        tn = max(1, min(N, target_bytes // block_c_bytes))
        while N % tn != 0:      # keep blocks exact (no ragged leading blocks)
            tn -= 1
        return tn, C
    # Tile the channel axis. TC must divide C and be a multiple of 8 (or == C)
    # to satisfy the (8, 128) tiling rule on the second-to-last dim.
    for cand in range(C, 0, -1):
        if C % cand != 0:
            continue
        if cand != C and cand % 8 != 0:
            continue
        if cand * HW * bytes_per_elem <= target_bytes:
            return 1, cand
    return 1, C  # fallback: single huge block (rely on vmem_limit_bytes)


def gem_forward(x, p_param, eps=1e-6):
    """x: (N, C, H, W) float32, p_param: (1,) float32 (pre-exp parameter)."""
    N, C, H, W = x.shape
    HW = H * W
    x_flat = x.reshape(N, C, HW)

    # Hoist the scalar transcendental + reciprocal out of the kernel.
    p = jnp.exp(p_param[0].astype(jnp.float32))
    scalars = jnp.stack([p, 1.0 / p]).astype(jnp.float32)   # (2,) -> SMEM

    TN, TC = _choose_tiles(N, C, HW)
    grid = (N // TN, C // TC)

    kernel = lambda s_ref, x_ref, o_ref: _gem_kernel(s_ref, x_ref, o_ref, eps=eps)

    n_elem = N * C * HW
    cost = pl.CostEstimate(
        flops=4 * n_elem,                       # clamp + mul + reduce-add + scale
        transcendentals=2 * n_elem + 2 * N * C,  # log/exp per element + per output
        bytes_accessed=n_elem * 4 + N * C * 4,
    )

    out = pl.pallas_call(
        kernel,
        out_shape=jax.ShapeDtypeStruct((N, C, 1), jnp.float32),
        grid=grid,
        in_specs=[
            pl.BlockSpec(memory_space=pltpu.MemorySpace.SMEM),       # [p, 1/p]
            pl.BlockSpec((TN, TC, HW), lambda i, j: (i, j, 0)),      # x tile
        ],
        out_specs=pl.BlockSpec((TN, TC, 1), lambda i, j: (i, j, 0)),
        compiler_params=pltpu.CompilerParams(
            dimension_semantics=("parallel", "parallel"),
            vmem_limit_bytes=32 * 1024 * 1024,   # explicit budget, safe on v5e/v6e/v7x
        ),
        cost_estimate=cost,
    )(scalars, x_flat)

    return out.reshape(N, C, 1, 1)


def gem_reference(x, p_param, eps=1e-6):
    p = jnp.exp(p_param[0])
    xc = jnp.maximum(x, eps)
    xp = xc ** p
    m = jnp.mean(xp, axis=(-2, -1), keepdims=True)
    return m ** (1.0 / p)


if __name__ == "__main__":
    key = jax.random.PRNGKey(0)
    N, C, H, W = 2, 4, 16, 16
    x = jax.random.uniform(key, (N, C, H, W), dtype=jnp.float32, minval=-0.5, maxval=2.0)

    # Deterministic parameter init, matching nn.Parameter(torch.ones(1) * log(3)).
    p_param = jnp.full((1,), jnp.log(3.0), dtype=jnp.float32)

    out = gem_forward(x, p_param)
    out = jax.block_until_ready(out)

    ref = gem_reference(x, p_param)
    assert out.shape == (N, C, 1, 1), out.shape
    assert jnp.allclose(out, ref, atol=1e-5, rtol=1e-5), (out, ref)

    print("KERNEL_OK")
</pallas_src>

<mosaic_0001>
module attributes {stable_mosaic.version = 11 : i64} {
  func.func @_lambda_(%arg0: i32, %arg1: i32, %arg2: memref<2xf32, #tpu.memory_space<smem>>, %arg3: memref<2x4x256xf32, #tpu.memory_space<vmem>>, %arg4: memref<2x4x1xf32, #tpu.memory_space<vmem>>) attributes {dimension_semantics = [#tpu.dimension_semantics<parallel>, #tpu.dimension_semantics<parallel>], iteration_bounds = array<i64: 1, 1>, scalar_prefetch = 0 : i64, scratch_operands = 0 : i64, tpu.core_type = #tpu.core_type<tc>, window_params = [{transform_indices = @transform_0, window_bounds = array<i64: 2>}, {transform_indices = @transform_1, window_bounds = array<i64: 2, 4, 256>}, {transform_indices = @transform_2, window_bounds = array<i64: 2, 4, 1>}]} {
    %c0 = arith.constant 0 : index
    %0 = memref.load %arg2[%c0] : memref<2xf32, #tpu.memory_space<smem>>
    %c1 = arith.constant 1 : index
    %1 = memref.load %arg2[%c1] : memref<2xf32, #tpu.memory_space<smem>>
    %c0_0 = arith.constant 0 : index
    %c0_1 = arith.constant 0 : index
    %c0_2 = arith.constant 0 : index
    %2 = vector.load %arg3[%c0_0, %c0_1, %c0_2] : memref<2x4x256xf32, #tpu.memory_space<vmem>>, vector<2x4x256xf32>
    %cst = arith.constant 9.99999997E-7 : f32
    %3 = vector.broadcast %cst : f32 to vector<2x4x256xf32>
    %4 = arith.maximumf %2, %3 : vector<2x4x256xf32>
    %5 = math.log %4 : vector<2x4x256xf32>
    %6 = vector.broadcast %0 : f32 to vector<2x4x256xf32>
    %7 = arith.mulf %6, %5 : vector<2x4x256xf32>
    %8 = math.exp %7 : vector<2x4x256xf32>
    %cst_3 = arith.constant dense<0.000000e+00> : vector<2x4xf32>
    %9 = vector.multi_reduction <add>, %8, %cst_3 [2] : vector<2x4x256xf32> to vector<2x4xf32>
    %10 = vector.shape_cast %9 : vector<2x4xf32> to vector<2x4x1xf32>
    %cst_4 = arith.constant 2.560000e+02 : f32
    %11 = vector.broadcast %cst_4 : f32 to vector<2x4x1xf32>
    %12 = arith.divf %10, %11 : vector<2x4x1xf32>
    %13 = math.log %12 : vector<2x4x1xf32>
    %14 = vector.broadcast %1 : f32 to vector<2x4x1xf32>
    %15 = arith.mulf %14, %13 : vector<2x4x1xf32>
    %16 = math.exp %15 : vector<2x4x1xf32>
    %c0_5 = arith.constant 0 : index
    %c0_6 = arith.constant 0 : index
    %c0_7 = arith.constant 0 : index
    %17 = vector.load %arg4[%c0_5, %c0_6, %c0_7] : memref<2x4x1xf32, #tpu.memory_space<vmem>>, vector<2x4x1xf32>
    tpu.vector_store %arg4[%c0_5, %c0_6, %c0_7], %16 {strides = array<i32>} : memref<2x4x1xf32, #tpu.memory_space<vmem>>, vector<2x4x1xf32>,
    return
  }
  func.func @transform_0(%arg0: i32, %arg1: i32) -> i32 {
    %c0_i32 = arith.constant 0 : i32
    %c0_i32_0 = arith.constant 0 : i32
    return %c0_i32 : i32
  }
  func.func @transform_1(%arg0: i32, %arg1: i32) -> (i32, i32, i32) {
    %c0_i32 = arith.constant 0 : i32
    %c0_i32_0 = arith.constant 0 : i32
    return %arg0, %arg1, %c0_i32 : i32, i32, i32
  }
  func.func @transform_2(%arg0: i32, %arg1: i32) -> (i32, i32, i32) {
    %c0_i32 = arith.constant 0 : i32
    %c0_i32_0 = arith.constant 0 : i32
    return %arg0, %arg1, %c0_i32 : i32, i32, i32
  }
}

</mosaic_0001>

<llo_original>
// kernel: tpu_custom_call.1
$region0: #{tpu_custom_call.1}
  #allocation0 [shape = 'u32[]', space=smem, size = 0x4, offset = 0x4, fixed_abs, tag = 'smem constant byte address 0x4 - core index']
  #allocation1 [shape = 'u32[72,128]{1,0:T(1,128)}', space=vmem, size = 0x9000, scoped, tag = 'internal scratch']
  %s0 = inlined_call_operand.hbm [shape: f32[2], index: 0, kind: input, shape index: {}]
  %s1 = inlined_call_operand.hbm [shape: f32[2,4,256], index: 1, kind: input, shape index: {}]
  %s2 = inlined_call_operand.vmem [shape: f32[2,4,1], index: 2, kind: output, shape index: {}]
  %s3 = sld [smem:[#allocation0]]
  $region26: #{tpu_custom_call.1} parent=0
    _
  %s5 = ssub.s32 1, %s3
  %s6 = scalar_select 0, %s5, %s3
  $region1: #{tpu_custom_call.1} parent=0
    #allocation2 [shape = 'u8[512]{0}', space=smem, size = 0x200, scoped, tag = 'input window, operand 0, single buffered']
    #allocation3 [shape = 's32[1]{0}', space=sflag, size = 0x4, scoped, tag = 'scoped memory for tpu_custom_call.1']
    #allocation4 [shape = 's32[1]{0}', space=sflag, size = 0x4, scoped, tag = 'scoped memory for tpu_custom_call.1']
    #allocation5 [shape = 'u8[8192]{0}', space=vmem, size = 0x2000, scoped, tag = 'input window, operand 1, single buffered']
    %7 = vsyncpa [#allocation4], 0
    %8 = vsyncpa [#allocation3], 0
    // Predicated region
    $region2: #{tpu_custom_call.1} parent=1 // pred_check
      _
    $region3: #{tpu_custom_call.1} parent=1 // pred_check_branch
      %10 = sbr.rel (0) target = $region5
    $region4: #{tpu_custom_call.1} parent=1 // pred_region
      %12 = vsyncadd [#allocation4], 0
      %s14 = sshll.u32 %s0, 4
      %s15 = int_to_ptr.hbm [resolvable:$true] %s14
      %17 = dma.hbm_to_smem %s15, 16, [#allocation2], [#allocation4]
    $region5: #{tpu_custom_call.1} parent=1 // pred_fallthru
      _
    // Predicated region
    $region6: #{tpu_custom_call.1} parent=1 // pred_check
      _
    $region7: #{tpu_custom_call.1} parent=1 // pred_check_branch
      %19 = sbr.rel (0) target = $region9
    $region8: #{tpu_custom_call.1} parent=1 // pred_region
      %21 = vsyncadd [#allocation3], 0
      %s22 = sshll.u32 %s1, 4
      %s23 = int_to_ptr.hbm [resolvable:$true] %s22
      %s24 = sshll.u32 [#allocation5], 4
      %s25 = int_to_ptr.vmem [resolvable:$true] %s24
      %30 = dma.hbm_to_vmem [thread:$0]  %s23, 256, %s25, [#allocation3], 128, 128, 8
    $region9: #{tpu_custom_call.1} parent=1 // pred_fallthru
      _
    // Predicated region
    $region10: #{tpu_custom_call.1} parent=1 // pred_check
      _
    $region11: #{tpu_custom_call.1} parent=1 // pred_check_branch
      %32 = sbr.rel (0) target = $region13
    $region12: #{tpu_custom_call.1} parent=1 // pred_region
      %34 = dma.done [#allocation4], 16
    $region13: #{tpu_custom_call.1} parent=1 // pred_fallthru
      _
    // Predicated region
    $region14: #{tpu_custom_call.1} parent=1 // pred_check
      _
    $region15: #{tpu_custom_call.1} parent=1 // pred_check_branch
      %36 = sbr.rel (0) target = $region17
    $region16: #{tpu_custom_call.1} parent=1 // pred_region
      %38 = dma.done [#allocation3], 256
    $region17: #{tpu_custom_call.1} parent=1 // pred_fallthru
      _
    %39 = sfence
    %s40 = sld [smem:[#allocation2]]
    %s41 = sld [smem:[#allocation2 + $0x1]]
    %v42 = vld [vmem:[#allocation5] sm:$0xff]
    %v43 = vld [vmem:[#allocation5 + $0x8] sm:$0xff]
    %v44 = vmax.f32 %v42, 1e-06
    %v45 = vmax.f32 %v43, 1e-06
    %v46 = vlog2.pop %v44
    %v47 = vmul.f32 %v46, 0.6931472
    %v48 = vlog2.pop %v45
    %v49 = vmul.f32 %v48, 0.6931472
    %v50 = vstv %s40
    %v51 = vmul.f32 %v50, %v47
    %v52 = vmul.f32 %v50, %v49
    %v53 = vmul.f32 %v51, 1.442695
    %v54 = vpow.pop %v53
    %v55 = vmul.f32 %v52, 1.442695
    %v56 = vpow.pop %v55
    %59 = vst [vmem:[#allocation1] ss:$2 sm:$0xff] %v54
    %v60 = vld.sshfl [vmem:[#allocation1] sm:$0xff pattern:$0x75316420]
    %v61 = vld.sshfl [vmem:[#allocation1 + $0x8] sm:$0xff pattern:$0x75316420]
    %s62 = scalar_lea.vmem [#allocation1], 16
    %63 = vst [vmem:[%s62] ss:$2 sm:$0xff] %v56
    %v64 = vld.sshfl [vmem:[#allocation1 + $0x10] sm:$0xff pattern:$0x75316420]
    %v65 = vld.sshfl [vmem:[#allocation1 + $0x18] sm:$0xff pattern:$0x75316420]
    %vm70 = vcmask 1043456
    %v71 = vsel %vm70, %v60, 0.0
    %v72 = vsel %vm70, %v61, 0.0
    %v73 = vadd.f32 %v71, %v72
    %74 = vadd.xlane.f32.xlu0 %v73
    %v75 = vpop.xlane.xlu0 %74
    %v76 = vsel %vm70, %v64, 0.0
    %v77 = vsel %vm70, %v65, 0.0
    %v78 = vadd.f32 %v76, %v77
    %79 = vadd.xlane.f32.xlu0 %v78
    %v80 = vpop.xlane.xlu0 %79
    %v81 = vrcp.pop 256.0
    %v82 = vmul.f32 256.0, %v81
    %v83 = vsub.f32 1.0, %v82
    %v84 = vmul.f32 %v81, %v83
    %v85 = vadd.f32 %v81, %v84
    %vm86 = vweird.f32 %v81
    %v87 = vsel %vm86, %v81, %v85
    %v88 = vmul.f32 %v75, %v87
    %v89 = vmul.f32 %v80, %v87
    %v90 = vlog2.pop %v88
    %v91 = vmul.f32 %v90, 0.6931472
    %v92 = vlog2.pop %v89
    %v93 = vmul.f32 %v92, 0.6931472
    %v94 = vstv %s41
    %v95 = vmul.f32 %v94, %v91
    %v96 = vmul.f32 %v94, %v93
    %v97 = vmul.f32 %v95, 1.442695
    %v98 = vpow.pop %v97
    %v99 = vmul.f32 %v96, 1.442695
    %v100 = vpow.pop %v99
    %vm101 = vcmask 3072
    %102 = vst.msk [vmem:[%s2] sm:$0xf] %vm101, %v98
    %103 = vst.msk [vmem:[%s2 + $0x4] sm:$0xf] %vm101, %v100
    // Predicated region
    $region18: #{tpu_custom_call.1} parent=1 // pred_check
      _
    $region19: #{tpu_custom_call.1} parent=1 // pred_check_branch
      %105 = sbr.rel (0) target = $region21
    $region20: #{tpu_custom_call.1} parent=1 // pred_region
      _
    $region21: #{tpu_custom_call.1} parent=1 // pred_fallthru
      _
    // Predicated region
    $region22: #{tpu_custom_call.1} parent=1 // pred_check
      _
    $region23: #{tpu_custom_call.1} parent=1 // pred_check_branch
      %107 = sbr.rel (0) target = $region25
    $region24: #{tpu_custom_call.1} parent=1 // pred_region
      _
    $region25: #{tpu_custom_call.1} parent=1 // pred_fallthru
      _
    %108 = vsyncpa [#allocation3], 1
    %109 = vsyncpa [#allocation4], 1

</llo_original>
